<compile_context>
chip_gen: v5e
topology: v5e:2x2
jax: 0.10.0
libtpu: 0.0.40
codegen_flags: <defaults>
</compile_context>

<pallas_src>
import functools

import jax
import jax.numpy as jnp
from jax.experimental import pallas as pl
from jax.experimental.pallas import tpu as pltpu


def _trainer_kernel(x0_ref, noise_ref, params_ref, loss_ref):
    # x0 / noise may arrive as bf16 (v6e/v7x feed); compute in f32 everywhere.
    x0 = x0_ref[...].astype(jnp.float32)        # (BC, HW)
    noise = noise_ref[...].astype(jnp.float32)  # (BC, HW)
    bc = x0.shape[0]

    # single packed param slab: [ w_bd (BC,BC) | a (BC,1) | b (BC,1) | cond (BC,1) | 0-pad ]
    p = params_ref[...]                         # (BC, 128) -- one f32 vreg
    w_bd = p[:, 0:bc]                           # block-diagonal channel mix
    a = p[:, bc:bc + 1]                         # sqrt(alphas_bar)[t] per row
    b = p[:, bc + 1:bc + 2]                     # sqrt(1 - alphas_bar)[t] per row
    cond = p[:, bc + 2:bc + 3]                  # (t, label) conditioning bias per row

    # forward diffusion: x_t = sqrt(abar_t) * x_0 + sqrt(1 - abar_t) * eps
    x_t = a * x0 + b * noise

    # stand-in model(x_t, t, labels): one MXU dot against the block-diagonal
    # channel-mix weight (+ lane-broadcast conditioning bias).
    pred = jnp.dot(w_bd, x_t, preferred_element_type=jnp.float32) + cond

    # F.mse_loss(model(x_t, t, labels), noise, reduction='none')
    diff = pred - noise
    loss_ref[...] = diff * diff


def make_channel_mix_blockdiag(w, B):
    """Hoisted, w-only constant: kron(I_B, w) -> (B*C, B*C). Build once, reuse."""
    return jnp.kron(jnp.eye(B, dtype=jnp.float32), w.astype(jnp.float32))


@jax.jit
def gaussian_diffusion_trainer_forward(x0, noise, a_t, b_t, w_bd, cond):
    """x0, noise: (B, C, H, W); a_t, b_t: (B,); w_bd: (B*C, B*C); cond: (B, C)."""
    B, C, H, W = x0.shape
    BC, HW = B * C, H * W

    # lane-dense (BC, HW) slabs; dtype preserved (pass bf16 on v6e/v7x if desired).
    x0f = x0.reshape(BC, HW)
    nf = noise.reshape(BC, HW)

    # pack all tiny operands into one lane-aligned (BC, >=128) f32 slab.
    a_rows = jnp.repeat(a_t.astype(jnp.float32), C)[:, None]          # (BC, 1)
    b_rows = jnp.repeat(b_t.astype(jnp.float32), C)[:, None]          # (BC, 1)
    cond_rows = cond.astype(jnp.float32).reshape(BC, 1)               # (BC, 1)
    params = jnp.concatenate(
        [w_bd.astype(jnp.float32), a_rows, b_rows, cond_rows], axis=1)
    param_lanes = max(128, ((params.shape[1] + 127) // 128) * 128)
    params = jnp.pad(params, ((0, 0), (0, param_lanes - params.shape[1])))

    vmem = pl.BlockSpec(memory_space=pltpu.MemorySpace.VMEM)
    loss = pl.pallas_call(
        _trainer_kernel,
        out_shape=jax.ShapeDtypeStruct((BC, HW), jnp.float32),
        in_specs=[vmem, vmem, vmem],
        out_specs=vmem,
        # no grid: single kernel invocation, whole arrays resident in VMEM
    )(x0f, nf, params)
    return loss.reshape(B, C, H, W)


def make_schedule(beta_1, beta_T, T):
    # torch registers float64 buffers; TPU uses float32 -- numerically close for T=1000.
    betas = jnp.linspace(beta_1, beta_T, T, dtype=jnp.float32)
    alphas = 1.0 - betas
    alphas_bar = jnp.cumprod(alphas)
    return jnp.sqrt(alphas_bar), jnp.sqrt(1.0 - alphas_bar)


if __name__ == "__main__":
    B, C, H, W = 2, 4, 16, 16
    T = 1000
    num_classes = 10

    key = jax.random.PRNGKey(0)
    k_x, k_lab, k_t, k_n, k_w, k_te, k_le = jax.random.split(key, 7)

    # inputs to forward(x_0, labels)
    x0 = jax.random.normal(k_x, (B, C, H, W), dtype=jnp.float32)
    labels = jax.random.randint(k_lab, (B,), 0, num_classes)

    # forward() glue: t ~ Uniform{0..T-1}, noise ~ N(0, I)  (deterministic via PRNGKey)
    t = jax.random.randint(k_t, (B,), 0, T)
    noise = jax.random.normal(k_n, (B, C, H, W), dtype=jnp.float32)

    # buffers from __init__ + the extract() gather -> per-batch scalars
    sqrt_ab, sqrt_1m_ab = make_schedule(1e-4, 0.02, T)
    a_t = sqrt_ab[t]         # extract(sqrt_alphas_bar, t, x_0.shape)
    b_t = sqrt_1m_ab[t]      # extract(sqrt_one_minus_alphas_bar, t, x_0.shape)

    # deterministic stand-in model parameters (constant prep hoisted out of the step)
    w = jax.random.normal(k_w, (C, C), dtype=jnp.float32) * 0.1
    w_bd = make_channel_mix_blockdiag(w, B)                 # built once, reused per step
    t_emb = jax.random.normal(k_te, (T, C), dtype=jnp.float32) * 0.1
    label_emb = jax.random.normal(k_le, (num_classes, C), dtype=jnp.float32) * 0.1
    cond = t_emb[t] + label_emb[labels]                     # (B, C)

    loss = gaussian_diffusion_trainer_forward(x0, noise, a_t, b_t, w_bd, cond)
    jax.block_until_ready(loss)

    # pure-JAX reference of the same expression (correctness gate)
    x_t_ref = a_t[:, None, None, None] * x0 + b_t[:, None, None, None] * noise
    pred_ref = jnp.einsum("oc,bchw->bohw", w, x_t_ref) + cond[:, :, None, None]
    loss_ref = (pred_ref - noise) ** 2

    assert loss.shape == (B, C, H, W) and loss.dtype == jnp.float32
    assert bool(jnp.all(loss >= 0.0))
    assert bool(jnp.allclose(loss, loss_ref, rtol=1e-4, atol=1e-4))

    print("KERNEL_OK")
</pallas_src>

<mosaic_0001>
module attributes {stable_mosaic.version = 11 : i64} {
  func.func @_trainer_kernel(%arg0: memref<8x256xf32, #tpu.memory_space<vmem>>, %arg1: memref<8x256xf32, #tpu.memory_space<vmem>>, %arg2: memref<8x128xf32, #tpu.memory_space<vmem>>, %arg3: memref<8x256xf32, #tpu.memory_space<vmem>>) attributes {dimension_semantics = [], scalar_prefetch = 0 : i64, scratch_operands = 0 : i64, tpu.core_type = #tpu.core_type<tc>} {
    %c0 = arith.constant 0 : index
    %c0_0 = arith.constant 0 : index
    %0 = vector.load %arg0[%c0, %c0_0] : memref<8x256xf32, #tpu.memory_space<vmem>>, vector<8x256xf32>
    %c0_1 = arith.constant 0 : index
    %c0_2 = arith.constant 0 : index
    %1 = vector.load %arg1[%c0_1, %c0_2] : memref<8x256xf32, #tpu.memory_space<vmem>>, vector<8x256xf32>
    %c0_3 = arith.constant 0 : index
    %c0_4 = arith.constant 0 : index
    %2 = vector.load %arg2[%c0_3, %c0_4] : memref<8x128xf32, #tpu.memory_space<vmem>>, vector<8x128xf32>
    %3 = vector.extract_strided_slice %2 {offsets = [0, 0], sizes = [8, 8], strides = [1, 1]} : vector<8x128xf32> to vector<8x8xf32>
    %4 = vector.extract_strided_slice %2 {offsets = [0, 8], sizes = [8, 1], strides = [1, 1]} : vector<8x128xf32> to vector<8x1xf32>
    %5 = vector.extract_strided_slice %2 {offsets = [0, 9], sizes = [8, 1], strides = [1, 1]} : vector<8x128xf32> to vector<8x1xf32>
    %6 = vector.extract_strided_slice %2 {offsets = [0, 10], sizes = [8, 1], strides = [1, 1]} : vector<8x128xf32> to vector<8x1xf32>
    %7 = vector.broadcast %4 : vector<8x1xf32> to vector<8x256xf32>
    %8 = arith.mulf %7, %0 : vector<8x256xf32>
    %9 = vector.broadcast %5 : vector<8x1xf32> to vector<8x256xf32>
    %10 = arith.mulf %9, %1 : vector<8x256xf32>
    %11 = arith.addf %8, %10 : vector<8x256xf32>
    %cst = arith.constant dense<0.000000e+00> : vector<8x256xf32>
    %12 = tpu.matmul %3, %11, %cst {dimension_numbers = #tpu.dot_dimension_numbers<[1], [0], [0], [1], [0, 0, 1, 1], [], []>} : vector<8x8xf32>, vector<8x256xf32>, vector<8x256xf32> -> vector<8x256xf32>
    %13 = vector.broadcast %6 : vector<8x1xf32> to vector<8x256xf32>
    %14 = arith.addf %12, %13 : vector<8x256xf32>
    %15 = arith.subf %14, %1 : vector<8x256xf32>
    %16 = arith.mulf %15, %15 : vector<8x256xf32>
    %c0_5 = arith.constant 0 : index
    %c0_6 = arith.constant 0 : index
    %17 = vector.load %arg3[%c0_5, %c0_6] : memref<8x256xf32, #tpu.memory_space<vmem>>, vector<8x256xf32>
    tpu.vector_store %arg3[%c0_5, %c0_6], %16 {strides = array<i32>} : memref<8x256xf32, #tpu.memory_space<vmem>>, vector<8x256xf32>,
    return
  }
}

</mosaic_0001>

<llo_original>
// kernel: gaussian_diffusion_trainer_forward.1
$region0: #{gaussian_diffusion_trainer_forward.1}
  #allocation0 [shape = 'u32[]', space=smem, size = 0x4, offset = 0x4, fixed_abs, tag = 'smem constant byte address 0x4 - core index']
  #allocation1 [shape = 'u32[72,128]{1,0:T(1,128)}', space=vmem, size = 0x9000, scoped, tag = 'internal scratch']
  %s0 = inlined_call_operand.vmem [shape: f32[8,256], index: 0, kind: input, shape index: {}]
  %s1 = inlined_call_operand.vmem [shape: f32[8,256], index: 1, kind: input, shape index: {}]
  %s2 = inlined_call_operand.vmem [shape: f32[8,128], index: 2, kind: input, shape index: {}]
  %s3 = inlined_call_operand.vmem [shape: f32[8,256], index: 3, kind: output, shape index: {}]
  %s4 = sld [smem:[#allocation0]]
  $region22: #{gaussian_diffusion_trainer_forward.1} parent=0
    _
  %s6 = ssub.s32 1, %s4
  %s7 = scalar_select 0, %s6, %s4
  // Predicated region
  $region2: #{gaussian_diffusion_trainer_forward.1} parent=0 // pred_check
    _
  $region3: #{gaussian_diffusion_trainer_forward.1} parent=0 // pred_check_branch
    %9 = sbr.rel (0) target = $region5
  $region4: #{gaussian_diffusion_trainer_forward.1} parent=0 // pred_region
    _
  $region5: #{gaussian_diffusion_trainer_forward.1} parent=0 // pred_fallthru
    _
  // Predicated region
  $region6: #{gaussian_diffusion_trainer_forward.1} parent=0 // pred_check
    _
  $region7: #{gaussian_diffusion_trainer_forward.1} parent=0 // pred_check_branch
    %11 = sbr.rel (0) target = $region9
  $region8: #{gaussian_diffusion_trainer_forward.1} parent=0 // pred_region
    _
  $region9: #{gaussian_diffusion_trainer_forward.1} parent=0 // pred_fallthru
    _
  // Predicated region
  $region10: #{gaussian_diffusion_trainer_forward.1} parent=0 // pred_check
    _
  $region11: #{gaussian_diffusion_trainer_forward.1} parent=0 // pred_check_branch
    %13 = sbr.rel (0) target = $region13
  $region12: #{gaussian_diffusion_trainer_forward.1} parent=0 // pred_region
    _
  $region13: #{gaussian_diffusion_trainer_forward.1} parent=0 // pred_fallthru
    _
  %v14 = vld [vmem:[%s0] sm:$0xff]
  %v15 = vld [vmem:[%s0 + $0x8] sm:$0xff]
  %v16 = vld [vmem:[%s1] sm:$0xff]
  %v17 = vld [vmem:[%s1 + $0x8] sm:$0xff]
  %v18 = vld [vmem:[%s2] sm:$0xff]
  %20 = vset.pattern.permute.xlu0 8
  %21 = vperm.xlu0 %20, %v18
  %v22 = vpop.permute.xlu0 %21
  %v24 = vmul.f32 %v22, %v14
  %v25 = vmul.f32 %v22, %v15
  %26 = vset.pattern.permute.xlu0 9
  %27 = vperm.xlu0 %26, %v18
  %v28 = vpop.permute.xlu0 %27
  %v30 = vmul.f32 %v28, %v16
  %v31 = vmul.f32 %v28, %v17
  %v32 = vadd.f32 %v24, %v30
  %v33 = vadd.f32 %v25, %v31
  %34 = vset.pattern.permute.xlu0 10
  %35 = vperm.xlu0 %34, %v18
  %v36 = vpop.permute.xlu0 %35
  %vm38 = vcmask 64512
  %v39 = vsel %vm38, %v18, 0
  %41 = vmatpush.msra.mxu0 0.0
  %42 = vmatpush.msra.mxu0 0.0
  %43 = vmatpush.msra.mxu0 0.0
  %44 = vmatpush.msra.mxu0 0.0
  %45 = vmatpush.msra.mxu0 0.0
  %46 = vmatpush.msra.mxu0 0.0
  %47 = vmatpush.msra.mxu0 0.0
  %48 = vmatpush.msra.mxu0 0.0
  %49 = vmatpush.msra.mxu0 0.0
  %50 = vmatpush.msra.mxu0 0.0
  %51 = vmatpush.msra.mxu0 0.0
  %52 = vmatpush.msra.mxu0 0.0
  %53 = vmatpush.msra.mxu0 0.0
  %54 = vmatpush.msra.mxu0 0.0
  %55 = vmatpush.msra.mxu0 0.0
  %56 = vmatpush.msra.mxu0 %v32
  %57 = vmatmul.f32.gmra.mxu0 %v39
  %v58 = vpop.f32.mrf.mxu0
  %v59 = vadd.f32 %v36, %v58
  %60 = vdwg.mxu0
  %61 = vmatpush.msra.mxu0 0.0
  %62 = vmatpush.msra.mxu0 0.0
  %63 = vmatpush.msra.mxu0 0.0
  %64 = vmatpush.msra.mxu0 0.0
  %65 = vmatpush.msra.mxu0 0.0
  %66 = vmatpush.msra.mxu0 0.0
  %67 = vmatpush.msra.mxu0 0.0
  %68 = vmatpush.msra.mxu0 0.0
  %69 = vmatpush.msra.mxu0 0.0
  %70 = vmatpush.msra.mxu0 0.0
  %71 = vmatpush.msra.mxu0 0.0
  %72 = vmatpush.msra.mxu0 0.0
  %73 = vmatpush.msra.mxu0 0.0
  %74 = vmatpush.msra.mxu0 0.0
  %75 = vmatpush.msra.mxu0 0.0
  %76 = vmatpush.msra.mxu0 %v33
  %77 = vmatmul.f32.gmra.mxu0 %v39
  %v78 = vpop.f32.mrf.mxu0
  %v79 = vadd.f32 %v36, %v78
  %80 = vdwg.mxu0
  %v81 = vsub.f32 %v59, %v16
  %v82 = vsub.f32 %v79, %v17
  %v83 = vmul.f32 %v81, %v81
  %v84 = vmul.f32 %v82, %v82
  %85 = vst [vmem:[%s3] sm:$0xff] %v83
  %86 = vst [vmem:[%s3 + $0x8] sm:$0xff] %v84
  // Predicated region
  $region14: #{gaussian_diffusion_trainer_forward.1} parent=0 // pred_check
    _
  $region15: #{gaussian_diffusion_trainer_forward.1} parent=0 // pred_check_branch
    %88 = sbr.rel (0) target = $region17
  $region16: #{gaussian_diffusion_trainer_forward.1} parent=0 // pred_region
    _
  $region17: #{gaussian_diffusion_trainer_forward.1} parent=0 // pred_fallthru
    _
  // Predicated region
  $region18: #{gaussian_diffusion_trainer_forward.1} parent=0 // pred_check
    _
  $region19: #{gaussian_diffusion_trainer_forward.1} parent=0 // pred_check_branch
    %90 = sbr.rel (0) target = $region21
  $region20: #{gaussian_diffusion_trainer_forward.1} parent=0 // pred_region
    _
  $region21: #{gaussian_diffusion_trainer_forward.1} parent=0 // pred_fallthru
    _

</llo_original>
